<compile_context>
chip_gen: v7x
topology: tpu7x:2x2x1
jax: 0.10.0
libtpu: 0.0.40
codegen_flags: <defaults>
</compile_context>

<pallas_src>
import numpy as np
import jax
import jax.numpy as jnp
from jax.experimental import pallas as pl
from jax.experimental.pallas import tpu as pltpu

_LANES = 128          # vreg lane width (same on v5e / v6e / v7x)
_SUBLANES = 8         # vreg sublane count
_MAX_TILE_ROWS = 1024 # 1024 x 128 x 4B = 512 KiB per block (well under VMEM)


def _identity_copy_kernel(x_ref, o_ref):
    # Whole-tile VMEM->VMEM assignment; Pallas pipelines HBM<->VMEM around it.
    o_ref[...] = x_ref[...]


def identity_attn_forward(x, orig_img):
    """Pallas equivalent of identity_attn.forward(x, orig_img) -> x."""
    del orig_img  # unused by the reference module; never read from HBM

    shape, dtype = x.shape, x.dtype
    n = int(np.prod(shape)) if len(shape) else 1

    # Lane-dense layout: flatten to (rows, 128), rows padded to a sublane/tile
    # multiple so the BlockSpec satisfies the (8, 128) constraint.
    rows = -(-n // _LANES)
    rows = -(-rows // _SUBLANES) * _SUBLANES
    tile = min(rows, _MAX_TILE_ROWS)
    rows_pad = -(-rows // tile) * tile
    n_pad = rows_pad * _LANES

    xf = x.reshape(-1)
    if n_pad != n:
        xf = jnp.pad(xf, (0, n_pad - n))
    xf = xf.reshape(rows_pad, _LANES)

    y = pl.pallas_call(
        _identity_copy_kernel,
        out_shape=jax.ShapeDtypeStruct((rows_pad, _LANES), dtype),
        grid=(rows_pad // tile,),
        in_specs=[pl.BlockSpec((tile, _LANES), lambda i: (i, 0))],
        out_specs=pl.BlockSpec((tile, _LANES), lambda i: (i, 0)),
        compiler_params=pltpu.CompilerParams(
            dimension_semantics=("parallel",),
            vmem_limit_bytes=32 * 1024 * 1024),
    )(xf)

    y = y.reshape(-1)
    if n_pad != n:
        y = y[:n]
    return y.reshape(shape)


if __name__ == "__main__":
    key = jax.random.PRNGKey(0)
    k_x, k_o = jax.random.split(key)

    # PyTorch-style NCHW inputs: x is the attended feature map, orig_img the
    # (unused) original image.
    x = jax.random.normal(k_x, (2, 4, 16, 16), dtype=jnp.float32)
    orig_img = jax.random.normal(k_o, (2, 3, 16, 16), dtype=jnp.float32)

    fwd = jax.jit(identity_attn_forward)
    out = fwd(x, orig_img)
    jax.block_until_ready(out)

    assert out.shape == x.shape and out.dtype == x.dtype
    assert bool(jnp.array_equal(out, x))
    print("KERNEL_OK")
</pallas_src>

<mosaic_0001>
module attributes {stable_mosaic.version = 11 : i64} {
  func.func @_identity_copy_kernel(%arg0: i32, %arg1: memref<16x128xf32, #tpu.memory_space<vmem>>, %arg2: memref<16x128xf32, #tpu.memory_space<vmem>>) attributes {dimension_semantics = [#tpu.dimension_semantics<parallel>], iteration_bounds = array<i64: 1>, scalar_prefetch = 0 : i64, scratch_operands = 0 : i64, tpu.core_type = #tpu.core_type<tc>, window_params = [{transform_indices = @transform_0, window_bounds = array<i64: 16, 128>}, {transform_indices = @transform_1, window_bounds = array<i64: 16, 128>}]} {
    %c0 = arith.constant 0 : index
    %c0_0 = arith.constant 0 : index
    %0 = vector.load %arg1[%c0, %c0_0] : memref<16x128xf32, #tpu.memory_space<vmem>>, vector<16x128xf32>
    %c0_1 = arith.constant 0 : index
    %c0_2 = arith.constant 0 : index
    %1 = vector.load %arg2[%c0_1, %c0_2] : memref<16x128xf32, #tpu.memory_space<vmem>>, vector<16x128xf32>
    tpu.vector_store %arg2[%c0_1, %c0_2], %0 {strides = array<i32>} : memref<16x128xf32, #tpu.memory_space<vmem>>, vector<16x128xf32>,
    return
  }
  func.func @transform_0(%arg0: i32) -> (i32, i32) {
    %c0_i32 = arith.constant 0 : i32
    %c0_i32_0 = arith.constant 0 : i32
    return %arg0, %c0_i32 : i32, i32
  }
  func.func @transform_1(%arg0: i32) -> (i32, i32) {
    %c0_i32 = arith.constant 0 : i32
    %c0_i32_0 = arith.constant 0 : i32
    return %arg0, %c0_i32 : i32, i32
  }
}

</mosaic_0001>

<llo_original>
// kernel: identity_attn_forward.1
$region0: #{identity_attn_forward.1}
  #allocation0 [shape = 'u32[]', space=smem, size = 0x4, offset = 0x4, fixed_abs, tag = 'smem constant byte address 0x4 - core index']
  #allocation1 [shape = 'u32[144,128]{1,0:T(1,128)}', space=vmem, size = 0x12000, scoped, tag = 'internal scratch']
  %s0 = inlined_call_operand.vmem [shape: f32[16,128], index: 0, kind: input, shape index: {}]
  %s1 = inlined_call_operand.vmem [shape: f32[16,128], index: 1, kind: output, shape index: {}]
  %s2 = sld [smem:[#allocation0]]
  $region14: #{identity_attn_forward.1} parent=0
    _
  %s4 = ssub.s32 1, %s2
  %s5 = scalar_select 0, %s4, %s2
  // Predicated region
  $region2: #{identity_attn_forward.1} parent=0 // pred_check
    _
  $region3: #{identity_attn_forward.1} parent=0 // pred_check_branch
    %7 = sbr.rel (0) target = $region5
  $region4: #{identity_attn_forward.1} parent=0 // pred_region
    _
  $region5: #{identity_attn_forward.1} parent=0 // pred_fallthru
    _
  %v8 = vld [vmem:[%s0] sm:$0xff]
  %v9 = vld [vmem:[%s0 + $0x8] sm:$0xff]
  %10 = vst [vmem:[%s1] sm:$0xff] %v8
  %11 = vst [vmem:[%s1 + $0x8] sm:$0xff] %v9
  // Predicated region
  $region6: #{identity_attn_forward.1} parent=0 // pred_check
    _
  $region7: #{identity_attn_forward.1} parent=0 // pred_check_branch
    %13 = sbr.rel (0) target = $region9
  $region8: #{identity_attn_forward.1} parent=0 // pred_region
    _
  $region9: #{identity_attn_forward.1} parent=0 // pred_fallthru
    _
  // Predicated region
  $region10: #{identity_attn_forward.1} parent=0 // pred_check
    _
  $region11: #{identity_attn_forward.1} parent=0 // pred_check_branch
    %15 = sbr.rel (0) target = $region13
  $region12: #{identity_attn_forward.1} parent=0 // pred_region
    _
  $region13: #{identity_attn_forward.1} parent=0 // pred_fallthru
    _

</llo_original>
